<compile_context>
chip_gen: v5e
topology: v5e:2x2
jax: 0.10.0
libtpu: 0.0.40
codegen_flags: <defaults>
</compile_context>

<pallas_src>
import functools

import jax
import jax.numpy as jnp
from jax.experimental import pallas as pl
from jax.experimental.pallas import tpu as pltpu


# ----------------------------- small helpers -------------------------------

def _round_up(x, m):
    return (x + m - 1) // m * m


def _cdiv(a, b):
    return (a + b - 1) // b


def _largest_divisor_leq(n, cap):
    cap = max(1, min(n, cap))
    for d in range(cap, 0, -1):
        if n % d == 0:
            return d
    return 1


def _vmem_capacity_bytes():
    """Physical VMEM per TensorCore (v5e/v6e: 128 MiB, v7x: 64 MiB)."""
    try:
        info = pltpu.get_tpu_info()
        cap = int(getattr(info, "vmem_capacity_bytes", 0))
        if cap > 0:
            return cap
    except Exception:
        pass
    return 64 * 1024 * 1024  # conservative fallback: safe on every generation


def _choose_tiling(N, HW, cin, cout, itemsize, per_step_bytes, tile_budget_bytes):
    """Pick (nb, T): batch-block size and lane-dense spatial tile per grid step.

    Sizes each step to ~per_step_bytes of sublane-padded x+out traffic so the
    fixed per-grid-step overhead is amortized, keeps the double-buffered tiles
    under tile_budget_bytes of VMEM, and keeps >=16 steps on large problems so
    v7x's two TensorCores both get work.
    """
    MIN_STEPS = 16
    MIN_STEP_BYTES = 512 * 1024
    sub = max(8, 32 // itemsize)  # sublane packing: 8 rows f32, 16 rows bf16
    per_lane = (_round_up(cin, sub) + _round_up(cout, sub)) * itemsize
    t_vmem = max(128, tile_budget_bytes // (2 * per_lane))   # double-buffered
    t_target = max(128, per_step_bytes // per_lane)
    t_cap = min(t_vmem, t_target)

    if HW <= t_cap:
        # Whole flattened spatial extent per step (full-dim block: exempt from
        # the 128-divisibility rule, no ragged lane tail).  Block over N to
        # reach the per-step byte target.  nb divides N so no partial batch
        # blocks are ever generated.
        T = HW
        nb_cap = max(1, t_cap // max(HW, 1))
        if N >= 2 * MIN_STEPS:  # keep enough steps for megacore + pipelining
            nb_cap = min(nb_cap, max(1, N // MIN_STEPS))
        nb = _largest_divisor_leq(N, nb_cap)
    else:
        # Tile the lane axis with a 128-multiple T; the last tile may be
        # partial (Pallas masks the out-of-bounds stores).
        T = (t_cap // 128) * 128
        nb = 1
        while (N * _cdiv(HW, T) < MIN_STEPS and T > 128
               and per_lane * (((T // 2) // 128) * 128) >= MIN_STEP_BYTES):
            T = max(128, ((T // 2) // 128) * 128)
    return nb, T


# --------------------------------- kernel ----------------------------------

def _final_conv_kernel(x_ref, w_ref, b_ref, o_ref, *, nb, compute_dtype):
    # x_ref: (nb, Cin, T)  w_ref: (Cout, Cin)  b_ref: (Cout, 1) f32
    # o_ref: (nb, Cout, T)
    w = w_ref[...]
    b = b_ref[...]
    for i in range(nb):                      # static unroll over the batch block
        xi = x_ref[i]
        if compute_dtype is not None:
            xi = xi.astype(compute_dtype)    # cast in-kernel: no extra HBM pass
        y = jnp.dot(w, xi, preferred_element_type=jnp.float32)  # MXU, f32 acc
        o_ref[i] = (y + b).astype(o_ref.dtype)


# -------------------------------- wrappers ----------------------------------

def final_conv_pallas(x_nchw, weight, bias, *, compute_dtype=None,
                      per_step_bytes=4 * 1024 * 1024):
    """1x1 conv via Pallas: x (N,Cin,H,W), weight (Cout,Cin[,1,1]), bias (Cout,)."""
    N, Cin, H, W = x_nchw.shape
    weight = weight.reshape(weight.shape[0], Cin)  # accept (Cout,Cin,1,1) or (Cout,Cin)
    Cout = weight.shape[0]
    out_dtype = x_nchw.dtype
    HW = H * W

    cdt = None if compute_dtype is None else jnp.dtype(compute_dtype)
    # Only the (tiny) weight is cast in the wrapper; x is streamed as-is and
    # cast inside the kernel if requested (avoids an extra HBM read+write pass).
    w = weight if cdt is None else weight.astype(cdt)
    b_col = bias.astype(jnp.float32).reshape(Cout, 1)
    x_flat = x_nchw.reshape(N, Cin, HW)  # contiguous reshape: free

    # Generation-aware VMEM budget: ~48 MiB scoped on v7x, ~96 MiB on v5e/v6e.
    vmem_cap = _vmem_capacity_bytes()
    vmem_limit = int(min(vmem_cap * 3 // 4, 100 * 1024 * 1024))
    tile_budget = vmem_limit // 2  # double-buffered x+out; rest = w/b + scratch

    itemsize = jnp.dtype(x_nchw.dtype).itemsize
    nb, T = _choose_tiling(N, HW, Cin, Cout, itemsize, per_step_bytes, tile_budget)
    grid = (_cdiv(N, nb), _cdiv(HW, T))

    kernel = functools.partial(_final_conv_kernel, nb=nb, compute_dtype=cdt)

    out_flat = pl.pallas_call(
        kernel,
        out_shape=jax.ShapeDtypeStruct((N, Cout, HW), out_dtype),
        grid_spec=pltpu.PrefetchScalarGridSpec(
            num_scalar_prefetch=0,
            grid=grid,
            in_specs=[
                pl.BlockSpec((nb, Cin, T), lambda n, t: (n, 0, t)),
                pl.BlockSpec((Cout, Cin), lambda n, t: (0, 0)),  # resident weight
                pl.BlockSpec((Cout, 1), lambda n, t: (0, 0)),    # resident bias
            ],
            out_specs=pl.BlockSpec((nb, Cout, T), lambda n, t: (n, 0, t)),
        ),
        compiler_params=pltpu.CompilerParams(
            dimension_semantics=("parallel", "parallel"),
            vmem_limit_bytes=vmem_limit,
        ),
    )(x_flat, w, b_col)

    return out_flat.reshape(N, Cout, H, W)


def final_conv(x_nchw, weight, bias, *, compute_dtype=None,
               min_pallas_bytes=2 * 1024 * 1024):
    """Forward of FinalConv.  Tiny problems (< ~2 MB of x) skip Pallas: fixed
    pallas_call overhead exceeds their data-movement time; a fused XLA einsum
    already wins there."""
    if x_nchw.size * jnp.dtype(x_nchw.dtype).itemsize < min_pallas_bytes:
        N, Cin, H, W = x_nchw.shape
        w2 = weight.reshape(weight.shape[0], Cin).astype(jnp.float32)
        y = jnp.einsum("oc,nchw->nohw", w2, x_nchw.astype(jnp.float32))
        return (y + bias.astype(jnp.float32)[None, :, None, None]).astype(x_nchw.dtype)
    return final_conv_pallas(x_nchw, weight, bias, compute_dtype=compute_dtype)


# ---------------------------------- tests -----------------------------------

if __name__ == "__main__":
    key = jax.random.PRNGKey(0)
    kx, kw, kb, kx2, kx3, kx4 = jax.random.split(key, 6)

    # Small shapes consistent with the module's forward.
    N, Cin, Cout, H, W = 2, 4, 3, 16, 16
    x = jax.random.normal(kx, (N, Cin, H, W), dtype=jnp.float32)
    # nn.Conv2d(input_ch, output_ch, kernel_size=1): weight (Cout,Cin,1,1), bias (Cout,)
    weight = jax.random.normal(kw, (Cout, Cin), dtype=jnp.float32) * 0.1
    bias = jax.random.normal(kb, (Cout,), dtype=jnp.float32) * 0.1

    def ref_conv(xx):
        return jnp.einsum("oc,nchw->nohw", weight, xx) + bias[None, :, None, None]

    # 1) Single-step path: whole problem in one tile, batch-blocked (nb=N).
    out = jax.block_until_ready(final_conv_pallas(x, weight, bias))
    assert out.shape == (N, Cout, H, W)
    assert jnp.allclose(out, ref_conv(x), atol=1e-5, rtol=1e-5)

    # 2) Ragged spatial extent (HW=130): full-extent lane block, no padding
    #    pass and no output slice.
    x2 = jax.random.normal(kx2, (1, Cin, 10, 13), dtype=jnp.float32)
    out2 = jax.block_until_ready(final_conv_pallas(x2, weight, bias))
    assert jnp.allclose(out2, ref_conv(x2), atol=1e-5, rtol=1e-5)

    # 3) Force the tiled multi-step path with a tiny per-step budget:
    #    HW=960 -> T=256, 4 lane tiles, last tile partial (masked stores).
    x3 = jax.random.normal(kx3, (2, Cin, 24, 40), dtype=jnp.float32)
    out3 = jax.block_until_ready(
        final_conv_pallas(x3, weight, bias, per_step_bytes=16 * 1024))
    assert jnp.allclose(out3, ref_conv(x3), atol=1e-5, rtol=1e-5)

    # 4) Multi-step over batch blocks (N=4, nb=2) via a small per-step budget.
    x4 = jax.random.normal(kx4, (4, Cin, 16, 16), dtype=jnp.float32)
    out4 = jax.block_until_ready(
        final_conv_pallas(x4, weight, bias, per_step_bytes=32 * 1024))
    assert jnp.allclose(out4, ref_conv(x4), atol=1e-5, rtol=1e-5)

    # 5) Auto-dispatch: this tiny problem falls back to the fused XLA einsum.
    out5 = jax.block_until_ready(final_conv(x, weight, bias))
    assert jnp.allclose(out5, ref_conv(x), atol=1e-5, rtol=1e-5)

    print("KERNEL_OK")
</pallas_src>

<mosaic_0001>
module attributes {stable_mosaic.version = 11 : i64} {
  func.func @_final_conv_kernel(%arg0: i32, %arg1: i32, %arg2: memref<2x4x256xf32, #tpu.memory_space<vmem>>, %arg3: memref<3x4xf32, #tpu.memory_space<vmem>>, %arg4: memref<3x1xf32, #tpu.memory_space<vmem>>, %arg5: memref<2x3x256xf32, #tpu.memory_space<vmem>>) attributes {dimension_semantics = [#tpu.dimension_semantics<parallel>, #tpu.dimension_semantics<parallel>], iteration_bounds = array<i64: 1, 1>, scalar_prefetch = 0 : i64, scratch_operands = 0 : i64, tpu.core_type = #tpu.core_type<tc>, window_params = [{transform_indices = @transform_0, window_bounds = array<i64: 2, 4, 256>}, {pipeline_mode = #tpu.pipeline_mode<synchronous>, transform_indices = @transform_1, window_bounds = array<i64: 3, 4>}, {pipeline_mode = #tpu.pipeline_mode<synchronous>, transform_indices = @transform_2, window_bounds = array<i64: 3, 1>}, {transform_indices = @transform_3, window_bounds = array<i64: 2, 3, 256>}]} {
    %c0 = arith.constant 0 : index
    %c0_0 = arith.constant 0 : index
    %0 = vector.load %arg3[%c0, %c0_0] : memref<3x4xf32, #tpu.memory_space<vmem>>, vector<3x4xf32>
    %c0_1 = arith.constant 0 : index
    %c0_2 = arith.constant 0 : index
    %1 = vector.load %arg4[%c0_1, %c0_2] : memref<3x1xf32, #tpu.memory_space<vmem>>, vector<3x1xf32>
    %c0_3 = arith.constant 0 : index
    %c0_4 = arith.constant 0 : index
    %c0_5 = arith.constant 0 : index
    %2 = vector.load %arg2[%c0_3, %c0_4, %c0_5] : memref<2x4x256xf32, #tpu.memory_space<vmem>>, vector<1x4x256xf32>
    %3 = vector.shape_cast %2 : vector<1x4x256xf32> to vector<4x256xf32>
    %cst = arith.constant dense<0.000000e+00> : vector<3x256xf32>
    %4 = tpu.matmul %0, %3, %cst {dimension_numbers = #tpu.dot_dimension_numbers<[1], [0], [0], [1], [0, 0, 1, 1], [], []>} : vector<3x4xf32>, vector<4x256xf32>, vector<3x256xf32> -> vector<3x256xf32>
    %5 = vector.broadcast %1 : vector<3x1xf32> to vector<3x256xf32>
    %6 = arith.addf %4, %5 : vector<3x256xf32>
    %c0_6 = arith.constant 0 : index
    %c0_7 = arith.constant 0 : index
    %c0_8 = arith.constant 0 : index
    %7 = vector.load %arg5[%c0_6, %c0_7, %c0_8] : memref<2x3x256xf32, #tpu.memory_space<vmem>>, vector<1x3x256xf32>
    %8 = vector.shape_cast %7 : vector<1x3x256xf32> to vector<3x256xf32>
    %9 = vector.shape_cast %6 : vector<3x256xf32> to vector<1x3x256xf32>
    tpu.vector_store %arg5[%c0_6, %c0_7, %c0_8], %9 {strides = array<i32>} : memref<2x3x256xf32, #tpu.memory_space<vmem>>, vector<1x3x256xf32>,
    %c1 = arith.constant 1 : index
    %c0_9 = arith.constant 0 : index
    %c0_10 = arith.constant 0 : index
    %10 = vector.load %arg2[%c1, %c0_9, %c0_10] : memref<2x4x256xf32, #tpu.memory_space<vmem>>, vector<1x4x256xf32>
    %11 = vector.shape_cast %10 : vector<1x4x256xf32> to vector<4x256xf32>
    %cst_11 = arith.constant dense<0.000000e+00> : vector<3x256xf32>
    %12 = tpu.matmul %0, %11, %cst_11 {dimension_numbers = #tpu.dot_dimension_numbers<[1], [0], [0], [1], [0, 0, 1, 1], [], []>} : vector<3x4xf32>, vector<4x256xf32>, vector<3x256xf32> -> vector<3x256xf32>
    %13 = vector.broadcast %1 : vector<3x1xf32> to vector<3x256xf32>
    %14 = arith.addf %12, %13 : vector<3x256xf32>
    %c1_12 = arith.constant 1 : index
    %c0_13 = arith.constant 0 : index
    %c0_14 = arith.constant 0 : index
    %15 = vector.load %arg5[%c1_12, %c0_13, %c0_14] : memref<2x3x256xf32, #tpu.memory_space<vmem>>, vector<1x3x256xf32>
    %16 = vector.shape_cast %15 : vector<1x3x256xf32> to vector<3x256xf32>
    %17 = vector.shape_cast %14 : vector<3x256xf32> to vector<1x3x256xf32>
    tpu.vector_store %arg5[%c1_12, %c0_13, %c0_14], %17 {strides = array<i32>} : memref<2x3x256xf32, #tpu.memory_space<vmem>>, vector<1x3x256xf32>,
    return
  }
  func.func @transform_0(%arg0: i32, %arg1: i32) -> (i32, i32, i32) {
    %c0_i32 = arith.constant 0 : i32
    %c0_i32_0 = arith.constant 0 : i32
    return %arg0, %c0_i32, %arg1 : i32, i32, i32
  }
  func.func @transform_1(%arg0: i32, %arg1: i32) -> (i32, i32) {
    %c0_i32 = arith.constant 0 : i32
    %c0_i32_0 = arith.constant 0 : i32
    %c0_i32_1 = arith.constant 0 : i32
    return %c0_i32, %c0_i32_0 : i32, i32
  }
  func.func @transform_2(%arg0: i32, %arg1: i32) -> (i32, i32) {
    %c0_i32 = arith.constant 0 : i32
    %c0_i32_0 = arith.constant 0 : i32
    %c0_i32_1 = arith.constant 0 : i32
    return %c0_i32, %c0_i32_0 : i32, i32
  }
  func.func @transform_3(%arg0: i32, %arg1: i32) -> (i32, i32, i32) {
    %c0_i32 = arith.constant 0 : i32
    %c0_i32_0 = arith.constant 0 : i32
    return %arg0, %c0_i32, %arg1 : i32, i32, i32
  }
}

</mosaic_0001>

<llo_original>
// kernel: tpu_custom_call.1
$region0: #{tpu_custom_call.1}
  #allocation0 [shape = 'u32[]', space=smem, size = 0x4, offset = 0x4, fixed_abs, tag = 'smem constant byte address 0x4 - core index']
  #allocation1 [shape = 'u32[72,128]{1,0:T(1,128)}', space=vmem, size = 0x9000, scoped, tag = 'internal scratch']
  %s0 = inlined_call_operand.hbm [shape: f32[2,4,256], index: 0, kind: input, shape index: {}]
  %s1 = inlined_call_operand.vmem [shape: f32[3,4], index: 1, kind: input, shape index: {}]
  %s2 = inlined_call_operand.vmem [shape: f32[3,1], index: 2, kind: input, shape index: {}]
  %s3 = inlined_call_operand.vmem [shape: f32[2,3,256], index: 3, kind: output, shape index: {}]
  %s4 = sld [smem:[#allocation0]]
  $region26: #{tpu_custom_call.1} parent=0
    _
  %s6 = ssub.s32 1, %s4
  %s7 = scalar_select 0, %s6, %s4
  $region1: #{tpu_custom_call.1} parent=0
    #allocation2 [shape = 'u8[8192]{0}', space=vmem, size = 0x2000, scoped, tag = 'input window, operand 0, single buffered']
    #allocation3 [shape = 's32[1]{0}', space=sflag, size = 0x4, scoped, tag = 'scoped memory for tpu_custom_call.1']
    %8 = vsyncpa [#allocation3], 0
    // Predicated region
    $region2: #{tpu_custom_call.1} parent=1 // pred_check
      _
    $region3: #{tpu_custom_call.1} parent=1 // pred_check_branch
      %10 = sbr.rel (0) target = $region5
    $region4: #{tpu_custom_call.1} parent=1 // pred_region
      %12 = vsyncadd [#allocation3], 0
      %s13 = sshll.u32 %s0, 4
      %s14 = int_to_ptr.hbm [resolvable:$true] %s13
      %s15 = sshll.u32 [#allocation2], 4
      %s16 = int_to_ptr.vmem [resolvable:$true] %s15
      %21 = dma.hbm_to_vmem [thread:$0]  %s14, 256, %s16, [#allocation3], 128, 128, 8
    $region5: #{tpu_custom_call.1} parent=1 // pred_fallthru
      _
    // Predicated region
    $region6: #{tpu_custom_call.1} parent=1 // pred_check
      _
    $region7: #{tpu_custom_call.1} parent=1 // pred_check_branch
      %23 = sbr.rel (0) target = $region9
    $region8: #{tpu_custom_call.1} parent=1 // pred_region
      _
    $region9: #{tpu_custom_call.1} parent=1 // pred_fallthru
      _
    // Predicated region
    $region10: #{tpu_custom_call.1} parent=1 // pred_check
      _
    $region11: #{tpu_custom_call.1} parent=1 // pred_check_branch
      %25 = sbr.rel (0) target = $region13
    $region12: #{tpu_custom_call.1} parent=1 // pred_region
      _
    $region13: #{tpu_custom_call.1} parent=1 // pred_fallthru
      _
    // Predicated region
    $region14: #{tpu_custom_call.1} parent=1 // pred_check
      _
    $region15: #{tpu_custom_call.1} parent=1 // pred_check_branch
      %27 = sbr.rel (0) target = $region17
    $region16: #{tpu_custom_call.1} parent=1 // pred_region
      %29 = dma.done [#allocation3], 256
    $region17: #{tpu_custom_call.1} parent=1 // pred_fallthru
      _
    %v30 = vld [vmem:[%s1] sm:$0x7]
    %v31 = vld [vmem:[%s2] sm:$0x7]
    %v32 = vld [vmem:[#allocation2] sm:$0xff]
    %34 = vset.pattern.permute.xlu0 0
    %35 = vperm.xlu0 %34, %v31
    %v36 = vpop.permute.xlu0 %35
    %39 = vst [vmem:[#allocation1] ss:$2 sm:$0xff] %v32
    %v40 = vld.sshfl [vmem:[#allocation1] sm:$0xff pattern:$0x75316420]
    %v41 = vld.sshfl [vmem:[#allocation1 + $0x8] sm:$0xff pattern:$0x75316420]
    %vm42 = vcmask 31744
    %v44 = vsel %vm42, %v30, 0
    %vm46 = vcmask 1043456
    %v47 = vsel %vm46, %v40, 0
    %v49 = vsel %vm46, %v41, 0
    %51 = vmatpush.msra.mxu0 0.0
    %52 = vmatpush.msra.mxu0 0.0
    %53 = vmatpush.msra.mxu0 0.0
    %54 = vmatpush.msra.mxu0 0.0
    %55 = vmatpush.msra.mxu0 0.0
    %56 = vmatpush.msra.mxu0 0.0
    %57 = vmatpush.msra.mxu0 0.0
    %58 = vmatpush.msra.mxu0 0.0
    %59 = vmatpush.msra.mxu0 0.0
    %60 = vmatpush.msra.mxu0 0.0
    %61 = vmatpush.msra.mxu0 0.0
    %62 = vmatpush.msra.mxu0 0.0
    %63 = vmatpush.msra.mxu0 0.0
    %64 = vmatpush.msra.mxu0 0.0
    %65 = vmatpush.msra.mxu0 0.0
    %66 = vmatpush.msra.mxu0 %v47
    %67 = vmatmul.f32.gmra.mxu0 %v44
    %v68 = vpop.f32.mrf.mxu0
    %v69 = vadd.f32 %v36, %v68
    %70 = vdwg.mxu0
    %71 = vmatpush.msra.mxu0 0.0
    %72 = vmatpush.msra.mxu0 0.0
    %73 = vmatpush.msra.mxu0 0.0
    %74 = vmatpush.msra.mxu0 0.0
    %75 = vmatpush.msra.mxu0 0.0
    %76 = vmatpush.msra.mxu0 0.0
    %77 = vmatpush.msra.mxu0 0.0
    %78 = vmatpush.msra.mxu0 0.0
    %79 = vmatpush.msra.mxu0 0.0
    %80 = vmatpush.msra.mxu0 0.0
    %81 = vmatpush.msra.mxu0 0.0
    %82 = vmatpush.msra.mxu0 0.0
    %83 = vmatpush.msra.mxu0 0.0
    %84 = vmatpush.msra.mxu0 0.0
    %85 = vmatpush.msra.mxu0 0.0
    %86 = vmatpush.msra.mxu0 %v49
    %87 = vmatmul.f32.gmra.mxu0 %v44
    %v88 = vpop.f32.mrf.mxu0
    %v89 = vadd.f32 %v36, %v88
    %90 = vdwg.mxu0
    %v93 = vrot.slane %v89, 4
    %v94 = vsel %vm46, %v69, %v93
    %96 = vst [vmem:[%s3] sm:$0x77] %v94
    %s97 = scalar_lea.vmem [#allocation2], 8
    %v98 = vld [vmem:[%s97] sm:$0xff]
    %100 = vst [vmem:[#allocation1] ss:$2 sm:$0xff] %v98
    %v101 = vld.sshfl [vmem:[#allocation1] sm:$0xff pattern:$0x75316420]
    %v102 = vld.sshfl [vmem:[#allocation1 + $0x8] sm:$0xff pattern:$0x75316420]
    %v103 = vsel %vm46, %v101, 0
    %v105 = vsel %vm46, %v102, 0
    %107 = vmatpush.msra.mxu0 0.0
    %108 = vmatpush.msra.mxu0 0.0
    %109 = vmatpush.msra.mxu0 0.0
    %110 = vmatpush.msra.mxu0 0.0
    %111 = vmatpush.msra.mxu0 0.0
    %112 = vmatpush.msra.mxu0 0.0
    %113 = vmatpush.msra.mxu0 0.0
    %114 = vmatpush.msra.mxu0 0.0
    %115 = vmatpush.msra.mxu0 0.0
    %116 = vmatpush.msra.mxu0 0.0
    %117 = vmatpush.msra.mxu0 0.0
    %118 = vmatpush.msra.mxu0 0.0
    %119 = vmatpush.msra.mxu0 0.0
    %120 = vmatpush.msra.mxu0 0.0
    %121 = vmatpush.msra.mxu0 0.0
    %122 = vmatpush.msra.mxu0 %v103
    %123 = vmatmul.f32.gmra.mxu0 %v44
    %v124 = vpop.f32.mrf.mxu0
    %v125 = vadd.f32 %v36, %v124
    %126 = vdwg.mxu0
    %127 = vmatpush.msra.mxu0 0.0
    %128 = vmatpush.msra.mxu0 0.0
    %129 = vmatpush.msra.mxu0 0.0
    %130 = vmatpush.msra.mxu0 0.0
    %131 = vmatpush.msra.mxu0 0.0
    %132 = vmatpush.msra.mxu0 0.0
    %133 = vmatpush.msra.mxu0 0.0
    %134 = vmatpush.msra.mxu0 0.0
    %135 = vmatpush.msra.mxu0 0.0
    %136 = vmatpush.msra.mxu0 0.0
    %137 = vmatpush.msra.mxu0 0.0
    %138 = vmatpush.msra.mxu0 0.0
    %139 = vmatpush.msra.mxu0 0.0
    %140 = vmatpush.msra.mxu0 0.0
    %141 = vmatpush.msra.mxu0 0.0
    %142 = vmatpush.msra.mxu0 %v105
    %143 = vmatmul.f32.gmra.mxu0 %v44
    %v144 = vpop.f32.mrf.mxu0
    %v145 = vadd.f32 %v36, %v144
    %146 = vdwg.mxu0
    %v149 = vrot.slane %v145, 4
    %v150 = vsel %vm46, %v125, %v149
    %s152 = scalar_lea.vmem %s3, 8
    %153 = vst [vmem:[%s152] sm:$0x77] %v150
    // Predicated region
    $region18: #{tpu_custom_call.1} parent=1 // pred_check
      _
    $region19: #{tpu_custom_call.1} parent=1 // pred_check_branch
      %155 = sbr.rel (0) target = $region21
    $region20: #{tpu_custom_call.1} parent=1 // pred_region
      _
    $region21: #{tpu_custom_call.1} parent=1 // pred_fallthru
      _
    // Predicated region
    $region22: #{tpu_custom_call.1} parent=1 // pred_check
      _
    $region23: #{tpu_custom_call.1} parent=1 // pred_check_branch
      %157 = sbr.rel (0) target = $region25
    $region24: #{tpu_custom_call.1} parent=1 // pred_region
      _
    $region25: #{tpu_custom_call.1} parent=1 // pred_fallthru
      _
    %158 = vsyncpa [#allocation3], 1

</llo_original>
